<compile_context>
chip_gen: v6e
topology: v6e:2x2x1
jax: 0.10.0
libtpu: 0.0.40
codegen_flags: <defaults>
</compile_context>

<pallas_src>
import math
import functools

import jax
import jax.numpy as jnp
from jax import lax
from jax.experimental import pallas as pl
from jax.experimental.pallas import tpu as pltpu


_EPS = 1e-12  # F.normalize default eps


# ---------------------------------------------------------------------------
# Kernel 1: row-wise L2 normalization (shared by input and weight).
# ---------------------------------------------------------------------------
def _l2norm_rows_kernel(x_ref, o_ref):
    x = x_ref[...].astype(jnp.float32)
    # 1 / max(||x||, eps) == rsqrt(max(sum(x^2), eps^2)); rsqrt runs on the EUP,
    # the divide becomes a multiply.  Zero (padding) rows map to zero.
    inv = lax.rsqrt(jnp.maximum(jnp.sum(x * x, axis=-1, keepdims=True),
                                _EPS * _EPS))
    o_ref[...] = (x * inv).astype(o_ref.dtype)


def _l2_normalize_rows(x, out_dtype, tile_rows):
    R, D = x.shape
    if R <= tile_rows:
        tr = R                                   # full extent (always legal)
    else:
        tr = max(8, (tile_rows // 8) * 8)        # sublane-aligned row tile
    grid = (pl.cdiv(R, tr),)
    return pl.pallas_call(
        _l2norm_rows_kernel,
        out_shape=jax.ShapeDtypeStruct((R, D), out_dtype),
        grid_spec=pltpu.PrefetchScalarGridSpec(
            num_scalar_prefetch=0,
            grid=grid,
            in_specs=[pl.BlockSpec((tr, D), lambda i: (i, 0))],
            out_specs=pl.BlockSpec((tr, D), lambda i: (i, 0)),
        ),
        compiler_params=pltpu.CompilerParams(
            dimension_semantics=("parallel",)),
    )(x)


# ---------------------------------------------------------------------------
# Kernel 2a: cosine matmul + ArcFace margin epilogue (training mode).
#   grid = (class tiles [outer], batch tiles [inner]) -> weight streamed once.
#   flag_ref (SMEM, scalar-prefetched) gates the margin math per tile.
# ---------------------------------------------------------------------------
def _arcface_margin_kernel(flag_ref, xn_ref, wn_ref, label_ref, out_ref, *,
                           s, s_cos_m, s_sin_m, th, s_mm, easy_margin):
    j = pl.program_id(0)                      # class tile
    i = pl.program_id(1)                      # batch tile
    nb = pl.num_programs(1)
    tc = out_ref.shape[-1]

    # cosine = xn @ wn.T : contract the last dim of both tiles directly on the
    # MXU (no XLU transpose of the [tc, D] weight tile), f32 accumulate.
    cosine = lax.dot_general(
        xn_ref[...], wn_ref[...],
        dimension_numbers=(((1,), (1,)), ((), ())),
        preferred_element_type=jnp.float32)                     # [tb, tc] f32
    scaled = cosine * s                                          # s * cosine

    flag = flag_ref[j * nb + i]

    @pl.when(flag == 0)
    def _():
        # No label of this batch tile lands in this class tile: every element
        # takes the cosine branch -> skip the whole margin epilogue.
        out_ref[...] = scaled.astype(out_ref.dtype)

    @pl.when(flag != 0)
    def _():
        # Upper clamp of clip(1-c^2, 0, 1) is redundant; max() protects sqrt
        # against bf16-induced |cos| > 1.
        sine = jnp.sqrt(jnp.maximum(1.0 - cosine * cosine, 0.0))
        phi = cosine * s_cos_m - sine * s_sin_m                  # s * phi
        if easy_margin:
            phi = jnp.where(cosine > 0.0, phi, scaled)
        else:
            phi = jnp.where(cosine > th, phi, scaled - s_mm)
        # One-hot blend as a single select; class iota offset by this C tile.
        cls = j * tc + lax.broadcasted_iota(jnp.int32, cosine.shape, 1)
        out = jnp.where(cls == label_ref[...], phi, scaled)
        out_ref[...] = out.astype(out_ref.dtype)


# Kernel 2b: eval mode -> just s * cosine.
def _cosine_scale_kernel(xn_ref, wn_ref, out_ref, *, s):
    cosine = lax.dot_general(
        xn_ref[...], wn_ref[...],
        dimension_numbers=(((1,), (1,)), ((), ())),
        preferred_element_type=jnp.float32)
    out_ref[...] = (s * cosine).astype(out_ref.dtype)


# ---------------------------------------------------------------------------
# Wrapper: ArcMarginProduct.forward
# ---------------------------------------------------------------------------
def arc_margin_product(x, weight, label=None, *, s=30.0, m=0.5,
                       easy_margin=False, training=True,
                       mxu_dtype=jnp.bfloat16, out_dtype=jnp.float32,
                       block_b=128, block_c=1024, norm_block_rows=256):
    """Pallas-backed ArcMarginProduct.forward.

    mxu_dtype:  dtype fed to the MXU (bf16 fast path; accumulation is f32).
                Use jnp.float32 for bit-faithful reference comparisons.
    out_dtype:  logits dtype.  bf16 halves the dominant HBM write on v6e
                (s=30-scaled logits then carry ~+-0.25 abs error); default f32
                for faithful semantics.
    block_b / block_c: (batch, class) tile sizes (class tiles lane-dense
                multiples of 128 when C is tiled).
    """
    B, D = x.shape
    C, D2 = weight.shape
    assert D == D2
    cos_m = math.cos(m)
    sin_m = math.sin(m)
    th = math.cos(math.pi - m)
    mm = math.sin(math.pi - m) * m

    # Tile selection: full extent when the dim fits a single tile (always
    # legal), otherwise an (8 / 128)-aligned tile with a cdiv grid + masked
    # edge tiles (no jnp.pad, no final slice).
    tb = B if B <= block_b else max(8, (block_b // 8) * 8)
    tc = C if C <= block_c else max(128, (block_c // 128) * 128)
    nb = pl.cdiv(B, tb)
    nc = pl.cdiv(C, tc)

    # Hoisted row normalization (each runs exactly once); original dtypes are
    # passed straight through, the f32 upcast happens inside the kernel.
    xn = _l2_normalize_rows(x, mxu_dtype, norm_block_rows)
    wn = _l2_normalize_rows(weight, mxu_dtype, norm_block_rows)

    # Class tiles on the OUTER grid axis, batch tiles innermost: the wn block
    # index is constant across the inner loop, so the CxD weight is DMA'd from
    # HBM exactly once.  Both axes are "parallel" (megacore sharding on v7x).
    grid = (nc, nb)
    out_shape = jax.ShapeDtypeStruct((B, C), out_dtype)

    in_isz = jnp.dtype(mxu_dtype).itemsize
    out_isz = jnp.dtype(out_dtype).itemsize
    vmem_est = (2 * (tb * D + tc * D) * in_isz       # double-buffered xn, wn
                + 2 * tb * tc * out_isz              # double-buffered output
                + 2 * tb * 4                         # label block
                + 6 * tb * tc * 4)                   # f32 epilogue temporaries
    vmem_limit = int(min(max(2 * vmem_est, 16 << 20), 64 << 20))
    compiler_params = pltpu.CompilerParams(
        dimension_semantics=("parallel", "parallel"),
        vmem_limit_bytes=vmem_limit)

    if training:
        assert label is not None
        label_i32 = label.reshape(-1).astype(jnp.int32)
        label2d = label_i32.reshape(B, 1)

        # Per-(class-tile, batch-tile) "contains a label" map, flattened to 1D
        # for compact SMEM layout; scalar-prefetched.
        lab_pad = jnp.full((nb * tb,), -1, jnp.int32).at[:B].set(label_i32)
        lab_tile = lab_pad.reshape(nb, tb) // tc               # -1 // tc == -1
        flags = (lab_tile[None, :, :] ==
                 jnp.arange(nc, dtype=jnp.int32)[:, None, None]
                 ).any(axis=-1).astype(jnp.int32).reshape(nc * nb)

        kernel = functools.partial(
            _arcface_margin_kernel, s=s, s_cos_m=s * cos_m, s_sin_m=s * sin_m,
            th=th, s_mm=s * mm, easy_margin=easy_margin)
        out = pl.pallas_call(
            kernel,
            out_shape=out_shape,
            grid_spec=pltpu.PrefetchScalarGridSpec(
                num_scalar_prefetch=1,
                grid=grid,
                in_specs=[
                    pl.BlockSpec((tb, D), lambda j, i, flg: (i, 0)),
                    pl.BlockSpec((tc, D), lambda j, i, flg: (j, 0)),
                    pl.BlockSpec((tb, 1), lambda j, i, flg: (i, 0)),
                ],
                out_specs=pl.BlockSpec((tb, tc), lambda j, i, flg: (i, j)),
            ),
            compiler_params=compiler_params,
        )(flags, xn, wn, label2d)
    else:
        kernel = functools.partial(_cosine_scale_kernel, s=s)
        out = pl.pallas_call(
            kernel,
            out_shape=out_shape,
            grid_spec=pltpu.PrefetchScalarGridSpec(
                num_scalar_prefetch=0,
                grid=grid,
                in_specs=[
                    pl.BlockSpec((tb, D), lambda j, i: (i, 0)),
                    pl.BlockSpec((tc, D), lambda j, i: (j, 0)),
                ],
                out_specs=pl.BlockSpec((tb, tc), lambda j, i: (i, j)),
            ),
            compiler_params=compiler_params,
        )(xn, wn)

    return out


# ---------------------------------------------------------------------------
# Pure-JAX reference (matches the PyTorch module, f32 math throughout).
# ---------------------------------------------------------------------------
def _reference(x, weight, label, *, s=30.0, m=0.5, easy_margin=False):
    eps = 1e-12
    xn = x / jnp.maximum(jnp.linalg.norm(x, axis=-1, keepdims=True), eps)
    wn = weight / jnp.maximum(jnp.linalg.norm(weight, axis=-1, keepdims=True), eps)
    cosine = xn @ wn.T
    sine = jnp.sqrt(jnp.clip(1.0 - cosine ** 2, 0.0, 1.0))
    phi = cosine * math.cos(m) - sine * math.sin(m)
    th = math.cos(math.pi - m)
    mm = math.sin(math.pi - m) * m
    if easy_margin:
        phi = jnp.where(cosine > 0.0, phi, cosine)
    else:
        phi = jnp.where(cosine > th, phi, cosine - mm)
    one_hot = jax.nn.one_hot(label, cosine.shape[1], dtype=jnp.float32)
    return (one_hot * phi + (1.0 - one_hot) * cosine) * s


def _reference_eval(x, weight, *, s=30.0):
    eps = 1e-12
    xn = x / jnp.maximum(jnp.linalg.norm(x, axis=-1, keepdims=True), eps)
    wn = weight / jnp.maximum(jnp.linalg.norm(weight, axis=-1, keepdims=True), eps)
    return s * (xn @ wn.T)


if __name__ == "__main__":
    # --- Test 1: small module config (single tile on each axis) -------------
    in_features = 32
    out_features = 16
    batch = 8
    s_, m_ = 30.0, 0.5

    key = jax.random.PRNGKey(0)
    k_w, k_x, k_l = jax.random.split(key, 3)

    # Deterministic xavier_uniform_-style init for weight [out, in].
    bound = math.sqrt(6.0 / (in_features + out_features))
    weight = jax.random.uniform(k_w, (out_features, in_features),
                                minval=-bound, maxval=bound, dtype=jnp.float32)
    x = jax.random.normal(k_x, (batch, in_features), dtype=jnp.float32)
    label = jax.random.randint(k_l, (batch,), 0, out_features, dtype=jnp.int32)

    out_f32 = arc_margin_product(x, weight, label, s=s_, m=m_,
                                 easy_margin=False, training=True,
                                 mxu_dtype=jnp.float32)
    out_bf16 = arc_margin_product(x, weight, label, s=s_, m=m_,
                                  easy_margin=False, training=True)
    out_eval = arc_margin_product(x, weight, None, s=s_, m=m_,
                                  training=False, mxu_dtype=jnp.float32)
    out_f32, out_bf16, out_eval = jax.block_until_ready(
        (out_f32, out_bf16, out_eval))

    ref_train = _reference(x, weight, label, s=s_, m=m_)
    ref_eval = _reference_eval(x, weight, s=s_)

    assert out_f32.shape == (batch, out_features)
    assert out_bf16.shape == (batch, out_features)
    assert out_eval.shape == (batch, out_features)
    assert jnp.allclose(out_f32, ref_train, atol=1e-3, rtol=1e-3), \
        "f32 training output mismatch vs reference"
    assert jnp.allclose(out_eval, ref_eval, atol=1e-3, rtol=1e-3), \
        "eval output mismatch vs reference"
    # bf16 MXU feed: inputs rounded to bf16, f32 accumulate; on s=30-scaled
    # unit-cosine logits the absolute error stays well under 0.35.
    assert jnp.allclose(out_bf16, ref_train, atol=0.35), \
        "bf16 fast-path output outside expected tolerance"

    # --- Test 2: non-dividing shapes, forced small tiles ---------------------
    # Exercises cdiv grids with masked edge tiles, the multi-tile grid
    # (class-outer / batch-inner) and the per-tile label-flag skip path.
    B2, C2, D2 = 20, 200, 64
    k_w2, k_x2, k_l2 = jax.random.split(jax.random.PRNGKey(1), 3)
    w2 = jax.random.normal(k_w2, (C2, D2), dtype=jnp.float32) * 0.1
    x2 = jax.random.normal(k_x2, (B2, D2), dtype=jnp.float32)
    l2 = jax.random.randint(k_l2, (B2,), 0, C2, dtype=jnp.int32)

    out2 = arc_margin_product(x2, w2, l2, s=s_, m=m_, training=True,
                              mxu_dtype=jnp.float32,
                              block_b=16, block_c=128, norm_block_rows=16)
    out2 = jax.block_until_ready(out2)
    ref2 = _reference(x2, w2, l2, s=s_, m=m_)
    assert out2.shape == (B2, C2)
    assert jnp.allclose(out2, ref2, atol=1e-3, rtol=1e-3), \
        "tiled (non-dividing) training output mismatch vs reference"

    print("KERNEL_OK")
</pallas_src>

<mosaic_0001>
module attributes {stable_mosaic.version = 11 : i64} {
  func.func @_l2norm_rows_kernel(%arg0: i32, %arg1: memref<8x32xf32, #tpu.memory_space<vmem>>, %arg2: memref<8x32xf32, #tpu.memory_space<vmem>>) attributes {dimension_semantics = [#tpu.dimension_semantics<parallel>], iteration_bounds = array<i64: 1>, scalar_prefetch = 0 : i64, scratch_operands = 0 : i64, tpu.core_type = #tpu.core_type<tc>, window_params = [{transform_indices = @transform_0, window_bounds = array<i64: 8, 32>}, {transform_indices = @transform_1, window_bounds = array<i64: 8, 32>}]} {
    %c0 = arith.constant 0 : index
    %c0_0 = arith.constant 0 : index
    %0 = vector.load %arg1[%c0, %c0_0] : memref<8x32xf32, #tpu.memory_space<vmem>>, vector<8x32xf32>
    %1 = arith.mulf %0, %0 : vector<8x32xf32>
    %cst = arith.constant dense<0.000000e+00> : vector<8xf32>
    %2 = vector.multi_reduction <add>, %1, %cst [1] : vector<8x32xf32> to vector<8xf32>
    %3 = vector.shape_cast %2 : vector<8xf32> to vector<8x1xf32>
    %cst_1 = arith.constant 1.000000e-24 : f32
    %4 = vector.broadcast %cst_1 : f32 to vector<8x1xf32>
    %5 = arith.maximumf %3, %4 : vector<8x1xf32>
    %6 = math.rsqrt %5 : vector<8x1xf32>
    %7 = vector.broadcast %6 : vector<8x1xf32> to vector<8x32xf32>
    %8 = arith.mulf %0, %7 : vector<8x32xf32>
    %c0_2 = arith.constant 0 : index
    %c0_3 = arith.constant 0 : index
    %9 = vector.load %arg2[%c0_2, %c0_3] : memref<8x32xf32, #tpu.memory_space<vmem>>, vector<8x32xf32>
    tpu.vector_store %arg2[%c0_2, %c0_3], %8 {strides = array<i32>} : memref<8x32xf32, #tpu.memory_space<vmem>>, vector<8x32xf32>,
    return
  }
  func.func @transform_0(%arg0: i32) -> (i32, i32) {
    %c0_i32 = arith.constant 0 : i32
    %c0_i32_0 = arith.constant 0 : i32
    return %arg0, %c0_i32 : i32, i32
  }
  func.func @transform_1(%arg0: i32) -> (i32, i32) {
    %c0_i32 = arith.constant 0 : i32
    %c0_i32_0 = arith.constant 0 : i32
    return %arg0, %c0_i32 : i32, i32
  }
}

</mosaic_0001>

<llo_original>
// kernel: tpu_custom_call.1
$region0: #{tpu_custom_call.1}
  #allocation0 [shape = 'u32[]', space=smem, size = 0x4, offset = 0x4, fixed_abs, tag = 'smem constant byte address 0x4 - core index']
  #allocation1 [shape = 'u32[144,128]{1,0:T(1,128)}', space=vmem, size = 0x12000, scoped, tag = 'internal scratch']
  %s0 = inlined_call_operand.hbm [shape: f32[8,32], index: 0, kind: input, shape index: {}]
  %s1 = inlined_call_operand.hbm [shape: f32[8,32], index: 1, kind: output, shape index: {}]
  %s2 = sld [smem:[#allocation0]]
  $region18: #{tpu_custom_call.1} parent=0
    _
  %s4 = ssub.s32 1, %s2
  %s5 = scalar_select 0, %s4, %s2
  $region1: #{tpu_custom_call.1} parent=0
    #allocation2 [shape = 'u8[4096]{0}', space=vmem, size = 0x1000, scoped, tag = 'input window, operand 0, single buffered']
    #allocation3 [shape = 's32[1]{0}', space=sflag, size = 0x4, scoped, tag = 'scoped memory for tpu_custom_call.1']
    #allocation4 [shape = 's32[1]{0}', space=sflag, size = 0x4, scoped, tag = 'scoped memory for tpu_custom_call.1']
    #allocation5 [shape = 'u8[4096]{0}', space=vmem, size = 0x1000, scoped, tag = 'output window, operand 0, single buffered']
    %6 = vsyncpa [#allocation3], 0
    %7 = vsyncpa [#allocation4], 0
    // Predicated region
    $region2: #{tpu_custom_call.1} parent=1 // pred_check
      _
    $region3: #{tpu_custom_call.1} parent=1 // pred_check_branch
      %9 = sbr.rel (0) target = $region5
    $region4: #{tpu_custom_call.1} parent=1 // pred_region
      %s11 = ssub.s32 128, 128
      %12 = vsyncadd [#allocation3], %s11
      %s14 = sshll.u32 [#allocation2], 4
      %s15 = int_to_ptr.vmem [resolvable:$true] %s14
      %17 = dma.hbm_to_vmem [thread:$0]  %s0, 128, %s15, [#allocation3]
    $region5: #{tpu_custom_call.1} parent=1 // pred_fallthru
      _
    // Predicated region
    $region6: #{tpu_custom_call.1} parent=1 // pred_check
      _
    $region7: #{tpu_custom_call.1} parent=1 // pred_check_branch
      %19 = sbr.rel (0) target = $region9
    $region8: #{tpu_custom_call.1} parent=1 // pred_region
      %20 = dma.done [#allocation3], 128
    $region9: #{tpu_custom_call.1} parent=1 // pred_fallthru
      _
    %v21 = vld [vmem:[#allocation2] sm:$0xff]
    %v22 = vmul.f32 %v21, %v21
    %vm23 = vcmask 261120
    %v24 = vsel %vm23, %v22, 0.0
    %25 = vadd.xlane.f32.xlu0 %v24
    %v26 = vpop.xlane.xlu0 %25
    %v27 = vmax.f32 %v26, 1e-24
    %v28 = vrsqrt.pop %v27
    %v29 = vmul.f32 %v21, %v28
    %30 = vst.msk [vmem:[#allocation5] sm:$0xff] %vm23, %v29
    // Predicated region
    $region10: #{tpu_custom_call.1} parent=1 // pred_check
      _
    $region11: #{tpu_custom_call.1} parent=1 // pred_check_branch
      %32 = sbr.rel (0) target = $region13
    $region12: #{tpu_custom_call.1} parent=1 // pred_region
      %s34 = ssub.s32 128, 128
      %35 = vsyncadd [#allocation4], %s34
      %s37 = sshll.u32 [#allocation5], 4
      %s38 = int_to_ptr.vmem [resolvable:$true] %s37
      %40 = dma.vmem_to_hbm [thread:$0]  %s38, 128, %s1, [#allocation4]
    $region13: #{tpu_custom_call.1} parent=1 // pred_fallthru
      _
    // Predicated region
    $region14: #{tpu_custom_call.1} parent=1 // pred_check
      _
    $region15: #{tpu_custom_call.1} parent=1 // pred_check_branch
      %42 = sbr.rel (0) target = $region17
    $region16: #{tpu_custom_call.1} parent=1 // pred_region
      %43 = dma.done [#allocation4], 128
    $region17: #{tpu_custom_call.1} parent=1 // pred_fallthru
      _
    %44 = vsyncpa [#allocation3], 1
    %45 = vsyncpa [#allocation4], 1

</llo_original>
